<compile_context>
chip_gen: v6e
topology: v6e:2x2x1
jax: 0.10.0
libtpu: 0.0.40
codegen_flags: <defaults>
</compile_context>

<pallas_src>
import jax
import jax.numpy as jnp
from jax.experimental import pallas as pl
from jax.experimental.pallas import tpu as pltpu


def _round_up(n, m):
    return ((n + m - 1) // m) * m


def decoder_fc_kernel(x_ref,
                      w1_ref, b1_ref,
                      w2_ref, b2_ref,
                      w3_ref, b3_ref,
                      w4_ref, b4_ref,
                      o_ref):
    """One batch tile of the MLP, fully in VMEM.

    x_ref is f32 (cast to bf16 on the VPU here); weights are resident bf16;
    dots accumulate in f32; bias-add + tanh in f32; output stored f32 at its
    true (lane-count 192) width.
    """
    x = x_ref[...].astype(jnp.bfloat16)  # in-kernel cast: free under DMA slack

    h = jnp.tanh(
        jnp.dot(x, w1_ref[...], preferred_element_type=jnp.float32) + b1_ref[...]
    )
    h = jnp.tanh(
        jnp.dot(h.astype(jnp.bfloat16), w2_ref[...],
                preferred_element_type=jnp.float32) + b2_ref[...]
    )
    h = jnp.tanh(
        jnp.dot(h.astype(jnp.bfloat16), w3_ref[...],
                preferred_element_type=jnp.float32) + b3_ref[...]
    )
    out = jnp.dot(h.astype(jnp.bfloat16), w4_ref[...],
                  preferred_element_type=jnp.float32) + b4_ref[...]

    o_ref[...] = out  # full-width store at the true output width


def prepare_params(params):
    """One-time parameter preprocessing (hoisted out of the per-call path).

    Input params: list of (w, b) with w: (in, out) f32, b: (1, out) f32.
    Returns weights cast to bf16 (MXU-native, halves resident bytes) and
    f32 biases, ready to be passed straight to decoder_fc_forward.
    """
    return [(w.astype(jnp.bfloat16), b.astype(jnp.float32)) for (w, b) in params]


def decoder_fc_forward(x, prepared_params, patch_size, *, block_rows=1024):
    """x: (B, coded_size) float32 -> (B, 3, patch_size, patch_size) float32."""
    (w1, b1), (w2, b2), (w3, b3), (w4, b4) = prepared_params
    B, coded = x.shape
    out_dim = patch_size * patch_size * 3  # 192 for patch_size=8

    # --- batch tiling ---------------------------------------------------
    # Multiple of 16 sublanes (bf16 packing). Prefer >=2 grid tiles when the
    # batch allows it so v7x's second TensorCore gets work ("parallel" axis).
    B16 = _round_up(B, 16)
    TB = min(_round_up(block_rows, 16), B16)
    if B16 > 16 and TB == B16:
        TB = _round_up(pl.cdiv(B16, 2), 16)
    Bp = _round_up(B, TB)

    xs = x
    if Bp != B:
        xs = jnp.pad(xs, ((0, Bp - B), (0, 0)))

    def resident(arr):
        # Whole-array block with a constant index_map: DMA'd once, stays in VMEM.
        return pl.BlockSpec(arr.shape, lambda i: (0, 0))

    hidden = 10
    flops = 2 * Bp * (coded * hidden + hidden * hidden * 2 + hidden * out_dim)
    bytes_accessed = (
        Bp * 4 * coded            # x stream (f32)
        + Bp * 4 * out_dim        # output writeback (f32)
        + 2 * (coded * hidden + 2 * hidden * hidden + hidden * out_dim)  # bf16 weights
        + 4 * (3 * hidden + out_dim)                                     # f32 biases
    )

    flat = pl.pallas_call(
        decoder_fc_kernel,
        out_shape=jax.ShapeDtypeStruct((Bp, out_dim), jnp.float32),
        grid=(Bp // TB,),
        in_specs=[
            pl.BlockSpec((TB, coded), lambda i: (i, 0)),   # streamed x tiles (f32)
            resident(w1), resident(b1),
            resident(w2), resident(b2),
            resident(w3), resident(b3),
            resident(w4), resident(b4),
        ],
        out_specs=pl.BlockSpec((TB, out_dim), lambda i: (i, 0)),
        compiler_params=pltpu.CompilerParams(
            dimension_semantics=("parallel",)),            # megacore batch sharding
        cost_estimate=pl.CostEstimate(
            flops=flops,
            transcendentals=3 * hidden * Bp,
            bytes_accessed=bytes_accessed),
    )(xs, w1, b1, w2, b2, w3, b3, w4, b4)

    if Bp != B:
        flat = flat[:B]
    # Same semantics as torch's x.view(-1, 3, P, P); free metadata op when Bp == B.
    return flat.reshape(-1, 3, patch_size, patch_size)


def init_params(key, coded_size, patch_size):
    """Deterministic synthetic parameters (PyTorch Linear-like uniform init).

    Weights are stored as (in_features, out_features) = transpose of torch layout.
    Biases are stored as (1, out_features) so they live as 2-D tiles in VMEM.
    """
    dims = [coded_size, 10, 10, 10, patch_size * patch_size * 3]
    params = []
    for i in range(4):
        fan_in, fan_out = dims[i], dims[i + 1]
        key, kw, kb = jax.random.split(key, 3)
        bound = 1.0 / (fan_in ** 0.5)
        w = jax.random.uniform(kw, (fan_in, fan_out), jnp.float32, -bound, bound)
        b = jax.random.uniform(kb, (1, fan_out), jnp.float32, -bound, bound)
        params.append((w, b))
    return params


if __name__ == "__main__":
    coded_size = 32
    patch_size = 8
    batch = 2

    key = jax.random.PRNGKey(0)
    key, kx = jax.random.split(key)
    x = jax.random.normal(kx, (batch, coded_size), jnp.float32)

    params = init_params(key, coded_size, patch_size)
    prepared = prepare_params(params)  # one-time bf16 cast, out of the hot path

    out = decoder_fc_forward(x, prepared, patch_size)
    out = jax.block_until_ready(out)

    assert out.shape == (batch, 3, patch_size, patch_size), out.shape
    assert out.dtype == jnp.float32

    # Reference 1: same math with the same bf16-rounded MXU operands and f32
    # accumulation (mirrors the kernel's precision) -> tight tolerance.
    def ref_forward_bf16(x, params):
        (w1, b1), (w2, b2), (w3, b3), (w4, b4) = params
        bf, f32 = jnp.bfloat16, jnp.float32
        h = jnp.tanh(jnp.dot(x.astype(bf), w1.astype(bf),
                             preferred_element_type=f32) + b1)
        h = jnp.tanh(jnp.dot(h.astype(bf), w2.astype(bf),
                             preferred_element_type=f32) + b2)
        h = jnp.tanh(jnp.dot(h.astype(bf), w3.astype(bf),
                             preferred_element_type=f32) + b3)
        o = jnp.dot(h.astype(bf), w4.astype(bf), preferred_element_type=f32) + b4
        return o.reshape(-1, 3, patch_size, patch_size)

    # Reference 2: pure f32 math (the original PyTorch semantics) -> loose
    # tolerance, bounds the bf16 streaming error.
    def ref_forward_f32(x, params):
        (w1, b1), (w2, b2), (w3, b3), (w4, b4) = params
        h = jnp.tanh(x @ w1 + b1)
        h = jnp.tanh(h @ w2 + b2)
        h = jnp.tanh(h @ w3 + b3)
        return (h @ w4 + b4).reshape(-1, 3, patch_size, patch_size)

    ref_bf16 = ref_forward_bf16(x, params)
    ref_f32 = ref_forward_f32(x, params)
    assert jnp.allclose(out, ref_bf16, atol=1e-3, rtol=1e-3)
    assert jnp.allclose(out, ref_f32, atol=3e-2, rtol=3e-2)

    print("KERNEL_OK")
</pallas_src>

<mosaic_0001>
module attributes {stable_mosaic.version = 11 : i64} {
  func.func @decoder_fc_kernel(%arg0: i32, %arg1: memref<16x32xf32, #tpu.memory_space<vmem>>, %arg2: memref<32x10xbf16, #tpu.memory_space<vmem>>, %arg3: memref<1x10xf32, #tpu.memory_space<vmem>>, %arg4: memref<10x10xbf16, #tpu.memory_space<vmem>>, %arg5: memref<1x10xf32, #tpu.memory_space<vmem>>, %arg6: memref<10x10xbf16, #tpu.memory_space<vmem>>, %arg7: memref<1x10xf32, #tpu.memory_space<vmem>>, %arg8: memref<10x192xbf16, #tpu.memory_space<vmem>>, %arg9: memref<1x192xf32, #tpu.memory_space<vmem>>, %arg10: memref<16x192xf32, #tpu.memory_space<vmem>>) attributes {dimension_semantics = [#tpu.dimension_semantics<parallel>], iteration_bounds = array<i64: 1>, scalar_prefetch = 0 : i64, scratch_operands = 0 : i64, tpu.core_type = #tpu.core_type<tc>, window_params = [{transform_indices = @transform_0, window_bounds = array<i64: 16, 32>}, {pipeline_mode = #tpu.pipeline_mode<synchronous>, transform_indices = @transform_1, window_bounds = array<i64: 32, 10>}, {pipeline_mode = #tpu.pipeline_mode<synchronous>, transform_indices = @transform_2, window_bounds = array<i64: 1, 10>}, {pipeline_mode = #tpu.pipeline_mode<synchronous>, transform_indices = @transform_3, window_bounds = array<i64: 10, 10>}, {pipeline_mode = #tpu.pipeline_mode<synchronous>, transform_indices = @transform_4, window_bounds = array<i64: 1, 10>}, {pipeline_mode = #tpu.pipeline_mode<synchronous>, transform_indices = @transform_5, window_bounds = array<i64: 10, 10>}, {pipeline_mode = #tpu.pipeline_mode<synchronous>, transform_indices = @transform_6, window_bounds = array<i64: 1, 10>}, {pipeline_mode = #tpu.pipeline_mode<synchronous>, transform_indices = @transform_7, window_bounds = array<i64: 10, 192>}, {pipeline_mode = #tpu.pipeline_mode<synchronous>, transform_indices = @transform_8, window_bounds = array<i64: 1, 192>}, {transform_indices = @transform_9, window_bounds = array<i64: 16, 192>}]} {
    %c0 = arith.constant 0 : index
    %c0_0 = arith.constant 0 : index
    %0 = vector.load %arg1[%c0, %c0_0] : memref<16x32xf32, #tpu.memory_space<vmem>>, vector<16x32xf32>
    %1 = arith.truncf %0 : vector<16x32xf32> to vector<16x32xbf16>
    %c0_1 = arith.constant 0 : index
    %c0_2 = arith.constant 0 : index
    %2 = vector.load %arg2[%c0_1, %c0_2] : memref<32x10xbf16, #tpu.memory_space<vmem>>, vector<32x10xbf16>
    %cst = arith.constant dense<0.000000e+00> : vector<16x10xf32>
    %3 = tpu.matmul %1, %2, %cst {dimension_numbers = #tpu.dot_dimension_numbers<[1], [0], [0], [1], [0, 0, 1, 1], [], []>} : vector<16x32xbf16>, vector<32x10xbf16>, vector<16x10xf32> -> vector<16x10xf32>
    %c0_3 = arith.constant 0 : index
    %c0_4 = arith.constant 0 : index
    %4 = vector.load %arg3[%c0_3, %c0_4] : memref<1x10xf32, #tpu.memory_space<vmem>>, vector<1x10xf32>
    %5 = vector.broadcast %4 : vector<1x10xf32> to vector<16x10xf32>
    %6 = arith.addf %3, %5 : vector<16x10xf32>
    %7 = math.tanh %6 : vector<16x10xf32>
    %8 = arith.truncf %7 : vector<16x10xf32> to vector<16x10xbf16>
    %c0_5 = arith.constant 0 : index
    %c0_6 = arith.constant 0 : index
    %9 = vector.load %arg4[%c0_5, %c0_6] : memref<10x10xbf16, #tpu.memory_space<vmem>>, vector<10x10xbf16>
    %cst_7 = arith.constant dense<0.000000e+00> : vector<16x10xf32>
    %10 = tpu.matmul %8, %9, %cst_7 {dimension_numbers = #tpu.dot_dimension_numbers<[1], [0], [0], [1], [0, 0, 1, 1], [], []>} : vector<16x10xbf16>, vector<10x10xbf16>, vector<16x10xf32> -> vector<16x10xf32>
    %c0_8 = arith.constant 0 : index
    %c0_9 = arith.constant 0 : index
    %11 = vector.load %arg5[%c0_8, %c0_9] : memref<1x10xf32, #tpu.memory_space<vmem>>, vector<1x10xf32>
    %12 = vector.broadcast %11 : vector<1x10xf32> to vector<16x10xf32>
    %13 = arith.addf %10, %12 : vector<16x10xf32>
    %14 = math.tanh %13 : vector<16x10xf32>
    %15 = arith.truncf %14 : vector<16x10xf32> to vector<16x10xbf16>
    %c0_10 = arith.constant 0 : index
    %c0_11 = arith.constant 0 : index
    %16 = vector.load %arg6[%c0_10, %c0_11] : memref<10x10xbf16, #tpu.memory_space<vmem>>, vector<10x10xbf16>
    %cst_12 = arith.constant dense<0.000000e+00> : vector<16x10xf32>
    %17 = tpu.matmul %15, %16, %cst_12 {dimension_numbers = #tpu.dot_dimension_numbers<[1], [0], [0], [1], [0, 0, 1, 1], [], []>} : vector<16x10xbf16>, vector<10x10xbf16>, vector<16x10xf32> -> vector<16x10xf32>
    %c0_13 = arith.constant 0 : index
    %c0_14 = arith.constant 0 : index
    %18 = vector.load %arg7[%c0_13, %c0_14] : memref<1x10xf32, #tpu.memory_space<vmem>>, vector<1x10xf32>
    %19 = vector.broadcast %18 : vector<1x10xf32> to vector<16x10xf32>
    %20 = arith.addf %17, %19 : vector<16x10xf32>
    %21 = math.tanh %20 : vector<16x10xf32>
    %22 = arith.truncf %21 : vector<16x10xf32> to vector<16x10xbf16>
    %c0_15 = arith.constant 0 : index
    %c0_16 = arith.constant 0 : index
    %23 = vector.load %arg8[%c0_15, %c0_16] : memref<10x192xbf16, #tpu.memory_space<vmem>>, vector<10x192xbf16>
    %cst_17 = arith.constant dense<0.000000e+00> : vector<16x192xf32>
    %24 = tpu.matmul %22, %23, %cst_17 {dimension_numbers = #tpu.dot_dimension_numbers<[1], [0], [0], [1], [0, 0, 1, 1], [], []>} : vector<16x10xbf16>, vector<10x192xbf16>, vector<16x192xf32> -> vector<16x192xf32>
    %c0_18 = arith.constant 0 : index
    %c0_19 = arith.constant 0 : index
    %25 = vector.load %arg9[%c0_18, %c0_19] : memref<1x192xf32, #tpu.memory_space<vmem>>, vector<1x192xf32>
    %26 = vector.broadcast %25 : vector<1x192xf32> to vector<16x192xf32>
    %27 = arith.addf %24, %26 : vector<16x192xf32>
    %c0_20 = arith.constant 0 : index
    %c0_21 = arith.constant 0 : index
    %28 = vector.load %arg10[%c0_20, %c0_21] : memref<16x192xf32, #tpu.memory_space<vmem>>, vector<16x192xf32>
    tpu.vector_store %arg10[%c0_20, %c0_21], %27 {strides = array<i32>} : memref<16x192xf32, #tpu.memory_space<vmem>>, vector<16x192xf32>,
    return
  }
  func.func @transform_0(%arg0: i32) -> (i32, i32) {
    %c0_i32 = arith.constant 0 : i32
    %c0_i32_0 = arith.constant 0 : i32
    return %arg0, %c0_i32 : i32, i32
  }
  func.func @transform_1(%arg0: i32) -> (i32, i32) {
    %c0_i32 = arith.constant 0 : i32
    %c0_i32_0 = arith.constant 0 : i32
    %c0_i32_1 = arith.constant 0 : i32
    return %c0_i32, %c0_i32_0 : i32, i32
  }
  func.func @transform_2(%arg0: i32) -> (i32, i32) {
    %c0_i32 = arith.constant 0 : i32
    %c0_i32_0 = arith.constant 0 : i32
    %c0_i32_1 = arith.constant 0 : i32
    return %c0_i32, %c0_i32_0 : i32, i32
  }
  func.func @transform_3(%arg0: i32) -> (i32, i32) {
    %c0_i32 = arith.constant 0 : i32
    %c0_i32_0 = arith.constant 0 : i32
    %c0_i32_1 = arith.constant 0 : i32
    return %c0_i32, %c0_i32_0 : i32, i32
  }
  func.func @transform_4(%arg0: i32) -> (i32, i32) {
    %c0_i32 = arith.constant 0 : i32
    %c0_i32_0 = arith.constant 0 : i32
    %c0_i32_1 = arith.constant 0 : i32
    return %c0_i32, %c0_i32_0 : i32, i32
  }
  func.func @transform_5(%arg0: i32) -> (i32, i32) {
    %c0_i32 = arith.constant 0 : i32
    %c0_i32_0 = arith.constant 0 : i32
    %c0_i32_1 = arith.constant 0 : i32
    return %c0_i32, %c0_i32_0 : i32, i32
  }
  func.func @transform_6(%arg0: i32) -> (i32, i32) {
    %c0_i32 = arith.constant 0 : i32
    %c0_i32_0 = arith.constant 0 : i32
    %c0_i32_1 = arith.constant 0 : i32
    return %c0_i32, %c0_i32_0 : i32, i32
  }
  func.func @transform_7(%arg0: i32) -> (i32, i32) {
    %c0_i32 = arith.constant 0 : i32
    %c0_i32_0 = arith.constant 0 : i32
    %c0_i32_1 = arith.constant 0 : i32
    return %c0_i32, %c0_i32_0 : i32, i32
  }
  func.func @transform_8(%arg0: i32) -> (i32, i32) {
    %c0_i32 = arith.constant 0 : i32
    %c0_i32_0 = arith.constant 0 : i32
    %c0_i32_1 = arith.constant 0 : i32
    return %c0_i32, %c0_i32_0 : i32, i32
  }
  func.func @transform_9(%arg0: i32) -> (i32, i32) {
    %c0_i32 = arith.constant 0 : i32
    %c0_i32_0 = arith.constant 0 : i32
    return %arg0, %c0_i32 : i32, i32
  }
}

</mosaic_0001>

<llo_original>
// kernel: tpu_custom_call.1
$region0: #{tpu_custom_call.1}
  #allocation0 [shape = 'u32[]', space=smem, size = 0x4, offset = 0x4, fixed_abs, tag = 'smem constant byte address 0x4 - core index']
  #allocation1 [shape = 'u32[144,128]{1,0:T(1,128)}', space=vmem, size = 0x12000, scoped, tag = 'internal scratch']
  %s0 = inlined_call_operand.vmem [shape: f32[16,32], index: 0, kind: input, shape index: {}]
  %s1 = inlined_call_operand.vmem [shape: bf16[32,10], index: 1, kind: input, shape index: {}]
  %s2 = inlined_call_operand.hbm [shape: f32[1,10], index: 2, kind: input, shape index: {}]
  %s3 = inlined_call_operand.hbm [shape: bf16[10,10], index: 3, kind: input, shape index: {}]
  %s4 = inlined_call_operand.hbm [shape: f32[1,10], index: 4, kind: input, shape index: {}]
  %s5 = inlined_call_operand.hbm [shape: bf16[10,10], index: 5, kind: input, shape index: {}]
  %s6 = inlined_call_operand.hbm [shape: f32[1,10], index: 6, kind: input, shape index: {}]
  %s7 = inlined_call_operand.vmem [shape: bf16[10,192], index: 7, kind: input, shape index: {}]
  %s8 = inlined_call_operand.vmem [shape: f32[1,192], index: 8, kind: input, shape index: {}]
  %s9 = inlined_call_operand.hbm [shape: f32[16,192], index: 9, kind: output, shape index: {}]
  %s10 = sld [smem:[#allocation0]]
  $region66: #{tpu_custom_call.1} parent=0
    _
  %s12 = ssub.s32 1, %s10
  %s13 = scalar_select 0, %s12, %s10
  $region1: #{tpu_custom_call.1} parent=0
    #allocation2 [shape = 'u8[512]{0}', space=vmem, size = 0x400, scoped, tag = 'input window, operand 2, single buffered']
    #allocation3 [shape = 's32[1]{0}', space=sflag, size = 0x4, scoped, tag = 'scoped memory for tpu_custom_call.1']
    #allocation4 [shape = 's32[1]{0}', space=sflag, size = 0x4, scoped, tag = 'scoped memory for tpu_custom_call.1']
    #allocation5 [shape = 'u8[4096]{0}', space=vmem, size = 0x1000, scoped, tag = 'input window, operand 3, single buffered']
    #allocation6 [shape = 's32[1]{0}', space=sflag, size = 0x4, scoped, tag = 'scoped memory for tpu_custom_call.1']
    #allocation7 [shape = 'u8[512]{0}', space=vmem, size = 0x400, scoped, tag = 'input window, operand 4, single buffered']
    #allocation8 [shape = 'u8[4096]{0}', space=vmem, size = 0x1000, scoped, tag = 'input window, operand 5, single buffered']
    #allocation9 [shape = 's32[1]{0}', space=sflag, size = 0x4, scoped, tag = 'scoped memory for tpu_custom_call.1']
    #allocation10 [shape = 'u8[512]{0}', space=vmem, size = 0x400, scoped, tag = 'input window, operand 6, single buffered']
    #allocation11 [shape = 'u8[16384]{0}', space=vmem, size = 0x4000, scoped, tag = 'output window, operand 0, single buffered']
    %14 = vsyncpa [#allocation3], 0
    %15 = vsyncpa [#allocation6], 0
    %16 = vsyncpa [#allocation9], 0
    %17 = vsyncpa [#allocation4], 0
    // Predicated region
    $region2: #{tpu_custom_call.1} parent=1 // pred_check
      _
    $region3: #{tpu_custom_call.1} parent=1 // pred_check_branch
      %19 = sbr.rel (0) target = $region5
    $region4: #{tpu_custom_call.1} parent=1 // pred_region
      _
    $region5: #{tpu_custom_call.1} parent=1 // pred_fallthru
      _
    // Predicated region
    $region6: #{tpu_custom_call.1} parent=1 // pred_check
      _
    $region7: #{tpu_custom_call.1} parent=1 // pred_check_branch
      %21 = sbr.rel (0) target = $region9
    $region8: #{tpu_custom_call.1} parent=1 // pred_region
      _
    $region9: #{tpu_custom_call.1} parent=1 // pred_fallthru
      _
    // Predicated region
    $region10: #{tpu_custom_call.1} parent=1 // pred_check
      _
    $region11: #{tpu_custom_call.1} parent=1 // pred_check_branch
      %23 = sbr.rel (0) target = $region13
    $region12: #{tpu_custom_call.1} parent=1 // pred_region
      %s25 = ssub.s32 16, 16
      %26 = vsyncadd [#allocation3], %s25
      %s28 = sshll.u32 [#allocation2], 4
      %s29 = int_to_ptr.vmem [resolvable:$true] %s28
      %31 = dma.hbm_to_vmem [thread:$0]  %s2, 16, %s29, [#allocation3]
    $region13: #{tpu_custom_call.1} parent=1 // pred_fallthru
      _
    // Predicated region
    $region14: #{tpu_custom_call.1} parent=1 // pred_check
      _
    $region15: #{tpu_custom_call.1} parent=1 // pred_check_branch
      %33 = sbr.rel (0) target = $region17
    $region16: #{tpu_custom_call.1} parent=1 // pred_region
      %s35 = ssub.s32 128, 128
      %36 = vsyncadd [#allocation6], %s35
      %s37 = sshll.u32 [#allocation5], 4
      %s38 = int_to_ptr.vmem [resolvable:$true] %s37
      %43 = dma.hbm_to_vmem [thread:$0]  %s3, 128, %s38, [#allocation6], 64, 64, 4
    $region17: #{tpu_custom_call.1} parent=1 // pred_fallthru
      _
    // Predicated region
    $region18: #{tpu_custom_call.1} parent=1 // pred_check
      _
    $region19: #{tpu_custom_call.1} parent=1 // pred_check_branch
      %45 = sbr.rel (0) target = $region21
    $region20: #{tpu_custom_call.1} parent=1 // pred_region
      %s47 = ssub.s32 16, 16
      %48 = vsyncadd [#allocation6], %s47
      %s50 = sshll.u32 [#allocation7], 4
      %s51 = int_to_ptr.vmem [resolvable:$true] %s50
      %53 = dma.hbm_to_vmem [thread:$0]  %s4, 16, %s51, [#allocation6]
    $region21: #{tpu_custom_call.1} parent=1 // pred_fallthru
      _
    // Predicated region
    $region22: #{tpu_custom_call.1} parent=1 // pred_check
      _
    $region23: #{tpu_custom_call.1} parent=1 // pred_check_branch
      %55 = sbr.rel (0) target = $region25
    $region24: #{tpu_custom_call.1} parent=1 // pred_region
      %s57 = ssub.s32 128, 128
      %58 = vsyncadd [#allocation9], %s57
      %s59 = sshll.u32 [#allocation8], 4
      %s60 = int_to_ptr.vmem [resolvable:$true] %s59
      %65 = dma.hbm_to_vmem [thread:$0]  %s5, 128, %s60, [#allocation9], 64, 64, 4
    $region25: #{tpu_custom_call.1} parent=1 // pred_fallthru
      _
    // Predicated region
    $region26: #{tpu_custom_call.1} parent=1 // pred_check
      _
    $region27: #{tpu_custom_call.1} parent=1 // pred_check_branch
      %67 = sbr.rel (0) target = $region29
    $region28: #{tpu_custom_call.1} parent=1 // pred_region
      %s69 = ssub.s32 16, 16
      %70 = vsyncadd [#allocation9], %s69
      %s72 = sshll.u32 [#allocation10], 4
      %s73 = int_to_ptr.vmem [resolvable:$true] %s72
      %75 = dma.hbm_to_vmem [thread:$0]  %s6, 16, %s73, [#allocation9]
    $region29: #{tpu_custom_call.1} parent=1 // pred_fallthru
      _
    // Predicated region
    $region30: #{tpu_custom_call.1} parent=1 // pred_check
      _
    $region31: #{tpu_custom_call.1} parent=1 // pred_check_branch
      %77 = sbr.rel (0) target = $region33
    $region32: #{tpu_custom_call.1} parent=1 // pred_region
      _
    $region33: #{tpu_custom_call.1} parent=1 // pred_fallthru
      _
    // Predicated region
    $region34: #{tpu_custom_call.1} parent=1 // pred_check
      _
    $region35: #{tpu_custom_call.1} parent=1 // pred_check_branch
      %79 = sbr.rel (0) target = $region37
    $region36: #{tpu_custom_call.1} parent=1 // pred_region
      _
    $region37: #{tpu_custom_call.1} parent=1 // pred_fallthru
      _
    // Predicated region
    $region38: #{tpu_custom_call.1} parent=1 // pred_check
      _
    $region39: #{tpu_custom_call.1} parent=1 // pred_check_branch
      %81 = sbr.rel (0) target = $region41
    $region40: #{tpu_custom_call.1} parent=1 // pred_region
      %82 = dma.done [#allocation3], 16
    $region41: #{tpu_custom_call.1} parent=1 // pred_fallthru
      _
    // Predicated region
    $region42: #{tpu_custom_call.1} parent=1 // pred_check
      _
    $region43: #{tpu_custom_call.1} parent=1 // pred_check_branch
      %84 = sbr.rel (0) target = $region45
    $region44: #{tpu_custom_call.1} parent=1 // pred_region
      %85 = dma.done [#allocation6], 128
    $region45: #{tpu_custom_call.1} parent=1 // pred_fallthru
      _
    // Predicated region
    $region46: #{tpu_custom_call.1} parent=1 // pred_check
      _
    $region47: #{tpu_custom_call.1} parent=1 // pred_check_branch
      %87 = sbr.rel (0) target = $region49
    $region48: #{tpu_custom_call.1} parent=1 // pred_region
      %88 = dma.done [#allocation6], 16
    $region49: #{tpu_custom_call.1} parent=1 // pred_fallthru
      _
    // Predicated region
    $region50: #{tpu_custom_call.1} parent=1 // pred_check
      _
    $region51: #{tpu_custom_call.1} parent=1 // pred_check_branch
      %90 = sbr.rel (0) target = $region53
    $region52: #{tpu_custom_call.1} parent=1 // pred_region
      %91 = dma.done [#allocation9], 128
    $region53: #{tpu_custom_call.1} parent=1 // pred_fallthru
      _
    // Predicated region
    $region54: #{tpu_custom_call.1} parent=1 // pred_check
      _
    $region55: #{tpu_custom_call.1} parent=1 // pred_check_branch
      %93 = sbr.rel (0) target = $region57
    $region56: #{tpu_custom_call.1} parent=1 // pred_region
      %94 = dma.done [#allocation9], 16
    $region57: #{tpu_custom_call.1} parent=1 // pred_fallthru
      _
    %v96 = vld [vmem:[%s0] sm:$0xff]
    %v97 = vld [vmem:[%s0 + $0x8] sm:$0xff]
    %v98 = vpack.c.bf16 %v97, %v96
    %v99 = vld [vmem:[%s1] sm:$0xf]
    %v100 = vld [vmem:[%s1 + $0x4] sm:$0xf]
    %v101 = vld [vmem:[%s1 + $0x8] sm:$0xf]
    %v102 = vld [vmem:[%s1 + $0xc] sm:$0xf]
    %v103 = vld [vmem:[#allocation2] sm:$0x1]
    %v105 = vlaneseq
    %v106 = vshrl.u32 %v105, 7
    %v107 = vsub.s32 0, %v106
    %v108 = vrot.slane %v103, %v107
    %v114 = vunpack.c.l.b16 %v99
    %v115 = vunpack.c.l.b16 %v100
    %v116 = vunpack.c.l.b16 %v101
    %v117 = vunpack.c.l.b16 %v102
    %v118 = vpack.c.b16 %v115, %v114
    %v119 = vpack.c.b16 %v117, %v116
    %vm122 = vcmask 261120
    %v124 = vsel %vm122, %v98, 0
    %126 = vmatprep.subr.bf16.mxu0 0
    %127 = vmatpush1.bf16.msra.mxu0 0
    %128 = vmatprep.subr.bf16.mxu0 0
    %129 = vmatpush1.bf16.msra.mxu0 0
    %130 = vmatprep.subr.bf16.mxu0 0
    %131 = vmatpush1.bf16.msra.mxu0 0
    %132 = vmatprep.subr.bf16.mxu0 0
    %133 = vmatpush1.bf16.msra.mxu0 0
    %134 = vmatprep.subr.bf16.mxu0 0
    %135 = vmatpush1.bf16.msra.mxu0 0
    %136 = vmatprep.subr.bf16.mxu0 0
    %137 = vmatpush1.bf16.msra.mxu0 0
    %138 = vmatprep.subr.bf16.mxu0 0
    %139 = vmatpush1.bf16.msra.mxu0 %v119
    %140 = vmatprep.subr.bf16.mxu0 0
    %141 = vmatpush1.bf16.msra.mxu0 %v118
    %142 = vmatprep.subr.bf16.mxu0 0
    %143 = vmatpush2.bf16.msra.mxu0 0
    %144 = vmatprep.subr.bf16.mxu0 0
    %145 = vmatpush2.bf16.msra.mxu0 0
    %146 = vmatprep.subr.bf16.mxu0 0
    %147 = vmatpush2.bf16.msra.mxu0 0
    %148 = vmatprep.subr.bf16.mxu0 0
    %149 = vmatpush2.bf16.msra.mxu0 0
    %150 = vmatprep.subr.bf16.mxu0 0
    %151 = vmatpush2.bf16.msra.mxu0 0
    %152 = vmatprep.subr.bf16.mxu0 0
    %153 = vmatpush2.bf16.msra.mxu0 0
    %154 = vmatprep.subr.bf16.mxu0 0
    %155 = vmatpush2.bf16.msra.mxu0 0
    %156 = vmatprep.subr.bf16.mxu0 0
    %157 = vmatpush2.bf16.msra.mxu0 0
    %158 = vmatprep.mubr.bf16.mxu0 0
    %159 = vmatmul.mubr.bf16.gmra.mxu0 %v124
    %v160 = vpop.f32.mrf.mxu0
    %v161 = vadd.f32 %v108, %v160
    %v162 = vpop.f32.mrf.mxu0
    %v163 = vpop.f32.mrf.mxu0
    %v164 = vadd.f32 %v108, %v163
    %v165 = vpop.f32.mrf.mxu0
    %166 = vdwg.mxu0
    %v167 = vtanh.pop %v161
    %v168 = vtanh.pop %v164
    %v169 = vpack.c.bf16 %v168, %v167
    %v170 = vld [vmem:[#allocation5] sm:$0xf]
    %v171 = vld [vmem:[#allocation5 + $0x4] sm:$0x1]
    %v172 = vld [vmem:[#allocation7] sm:$0x1]
    %v174 = vlaneseq
    %v175 = vshrl.u32 %v174, 7
    %v176 = vsub.s32 0, %v175
    %v177 = vrot.slane %v172, %v176
    %v181 = vunpack.c.l.b16 %v170
    %v182 = vunpack.c.l.b16 %v171
    %v183 = vpack.c.b16 %v182, %v181
    %vm184 = vcmask 80896
    %v186 = vsel %vm184, %v169, 0
    %vm188 = vcmask 1044480
    %v190 = vsel %vm188, %v183, 0
    %192 = vmatprep.subr.bf16.mxu0 0
    %193 = vmatpush1.bf16.msra.mxu0 0
    %194 = vmatprep.subr.bf16.mxu0 0
    %195 = vmatpush1.bf16.msra.mxu0 0
    %196 = vmatprep.subr.bf16.mxu0 0
    %197 = vmatpush1.bf16.msra.mxu0 0
    %198 = vmatprep.subr.bf16.mxu0 0
    %199 = vmatpush1.bf16.msra.mxu0 0
    %200 = vmatprep.subr.bf16.mxu0 0
    %201 = vmatpush1.bf16.msra.mxu0 0
    %202 = vmatprep.subr.bf16.mxu0 0
    %203 = vmatpush1.bf16.msra.mxu0 0
    %204 = vmatprep.subr.bf16.mxu0 0
    %205 = vmatpush1.bf16.msra.mxu0 0
    %206 = vmatprep.subr.bf16.mxu0 0
    %207 = vmatpush1.bf16.msra.mxu0 %v190
    %208 = vmatprep.subr.bf16.mxu0 0
    %209 = vmatpush2.bf16.msra.mxu0 0
    %210 = vmatprep.subr.bf16.mxu0 0
    %211 = vmatpush2.bf16.msra.mxu0 0
    %212 = vmatprep.subr.bf16.mxu0 0
    %213 = vmatpush2.bf16.msra.mxu0 0
    %214 = vmatprep.subr.bf16.mxu0 0
    %215 = vmatpush2.bf16.msra.mxu0 0
    %216 = vmatprep.subr.bf16.mxu0 0
    %217 = vmatpush2.bf16.msra.mxu0 0
    %218 = vmatprep.subr.bf16.mxu0 0
    %219 = vmatpush2.bf16.msra.mxu0 0
    %220 = vmatprep.subr.bf16.mxu0 0
    %221 = vmatpush2.bf16.msra.mxu0 0
    %222 = vmatprep.subr.bf16.mxu0 0
    %223 = vmatpush2.bf16.msra.mxu0 0
    %224 = vmatprep.mubr.bf16.mxu0 0
    %225 = vmatmul.mubr.bf16.gmra.mxu0 %v186
    %v226 = vpop.f32.mrf.mxu0
    %v227 = vadd.f32 %v177, %v226
    %v228 = vpop.f32.mrf.mxu0
    %v229 = vpop.f32.mrf.mxu0
    %v230 = vadd.f32 %v177, %v229
    %v231 = vpop.f32.mrf.mxu0
    %232 = vdwg.mxu0
    %v233 = vtanh.pop %v227
    %v234 = vtanh.pop %v230
    %v235 = vpack.c.bf16 %v234, %v233
    %v236 = vld [vmem:[#allocation8] sm:$0xf]
    %v237 = vld [vmem:[#allocation8 + $0x4] sm:$0x1]
    %v238 = vld [vmem:[#allocation10] sm:$0x1]
    %v240 = vlaneseq
    %v241 = vshrl.u32 %v240, 7
    %v242 = vsub.s32 0, %v241
    %v243 = vrot.slane %v238, %v242
    %v247 = vunpack.c.l.b16 %v236
    %v248 = vunpack.c.l.b16 %v237
    %v249 = vpack.c.b16 %v248, %v247
    %v251 = vsel %vm184, %v235, 0
    %v254 = vsel %vm188, %v249, 0
    %256 = vmatprep.subr.bf16.mxu0 0
    %257 = vmatpush1.bf16.msra.mxu0 0
    %258 = vmatprep.subr.bf16.mxu0 0
    %259 = vmatpush1.bf16.msra.mxu0 0
    %260 = vmatprep.subr.bf16.mxu0 0
    %261 = vmatpush1.bf16.msra.mxu0 0
    %262 = vmatprep.subr.bf16.mxu0 0
    %263 = vmatpush1.bf16.msra.mxu0 0
    %264 = vmatprep.subr.bf16.mxu0 0
    %265 = vmatpush1.bf16.msra.mxu0 0
    %266 = vmatprep.subr.bf16.mxu0 0
    %267 = vmatpush1.bf16.msra.mxu0 0
    %268 = vmatprep.subr.bf16.mxu0 0
    %269 = vmatpush1.bf16.msra.mxu0 0
    %270 = vmatprep.subr.bf16.mxu0 0
    %271 = vmatpush1.bf16.msra.mxu0 %v254
    %272 = vmatprep.subr.bf16.mxu0 0
    %273 = vmatpush2.bf16.msra.mxu0 0
    %274 = vmatprep.subr.bf16.mxu0 0
    %275 = vmatpush2.bf16.msra.mxu0 0
    %276 = vmatprep.subr.bf16.mxu0 0
    %277 = vmatpush2.bf16.msra.mxu0 0
    %278 = vmatprep.subr.bf16.mxu0 0
    %279 = vmatpush2.bf16.msra.mxu0 0
    %280 = vmatprep.subr.bf16.mxu0 0
    %281 = vmatpush2.bf16.msra.mxu0 0
    %282 = vmatprep.subr.bf16.mxu0 0
    %283 = vmatpush2.bf16.msra.mxu0 0
    %284 = vmatprep.subr.bf16.mxu0 0
    %285 = vmatpush2.bf16.msra.mxu0 0
    %286 = vmatprep.subr.bf16.mxu0 0
    %287 = vmatpush2.bf16.msra.mxu0 0
    %288 = vmatprep.mubr.bf16.mxu0 0
    %289 = vmatmul.mubr.bf16.gmra.mxu0 %v251
    %v290 = vpop.f32.mrf.mxu0
    %v291 = vadd.f32 %v243, %v290
    %v292 = vpop.f32.mrf.mxu0
    %v293 = vpop.f32.mrf.mxu0
    %v294 = vadd.f32 %v243, %v293
    %v295 = vpop.f32.mrf.mxu0
    %296 = vdwg.mxu0
    %v297 = vtanh.pop %v291
    %v298 = vtanh.pop %v294
    %v299 = vpack.c.bf16 %v298, %v297
    %v300 = vld [vmem:[%s7] sm:$0xff]
    %v301 = vld [vmem:[%s7 + $0x8] sm:$0x11]
    %v302 = vld [vmem:[%s8] sm:$0x3]
    %v304 = vlaneseq
    %v305 = vshrl.u32 %v304, 7
    %v306 = vsub.s32 0, %v305
    %v307 = vrot.slane %v302, %v306
    %v308 = vlaneseq
    %v309 = vshrl.u32 %v308, 7
    %v310 = vsub.s32 1, %v309
    %v311 = vrot.slane %v302, %v310
    %v316 = vunpack.c.l.b16 %v300
    %v317 = vunpack.c.h.b16 %v300
    %v318 = vunpack.c.l.b16 %v301
    %v319 = vunpack.c.h.b16 %v301
    %v320 = vpack.c.b16 %v318, %v316
    %v321 = vpack.c.b16 %v319, %v317
    %v323 = vsel %vm184, %v299, 0
    %v326 = vsel %vm188, %v320, 0
    %v329 = vsel %vm188, %v321, 0
    %331 = vmatprep.subr.bf16.mxu0 0
    %332 = vmatpush1.bf16.msra.mxu0 0
    %333 = vmatprep.subr.bf16.mxu0 0
    %334 = vmatpush1.bf16.msra.mxu0 0
    %335 = vmatprep.subr.bf16.mxu0 0
    %336 = vmatpush1.bf16.msra.mxu0 0
    %337 = vmatprep.subr.bf16.mxu0 0
    %338 = vmatpush1.bf16.msra.mxu0 0
    %339 = vmatprep.subr.bf16.mxu0 0
    %340 = vmatpush1.bf16.msra.mxu0 0
    %341 = vmatprep.subr.bf16.mxu0 0
    %342 = vmatpush1.bf16.msra.mxu0 0
    %343 = vmatprep.subr.bf16.mxu0 0
    %344 = vmatpush1.bf16.msra.mxu0 0
    %345 = vmatprep.subr.bf16.mxu0 %v329
    %346 = vmatpush1.bf16.msra.mxu0 %v326
    %347 = vmatprep.subr.bf16.mxu0 0
    %348 = vmatpush2.bf16.msra.mxu0 0
    %349 = vmatprep.subr.bf16.mxu0 0
    %350 = vmatpush2.bf16.msra.mxu0 0
    %351 = vmatprep.subr.bf16.mxu0 0
    %352 = vmatpush2.bf16.msra.mxu0 0
    %353 = vmatprep.subr.bf16.mxu0 0
    %354 = vmatpush2.bf16.msra.mxu0 0
    %355 = vmatprep.subr.bf16.mxu0 0
    %356 = vmatpush2.bf16.msra.mxu0 0
    %357 = vmatprep.subr.bf16.mxu0 0
    %358 = vmatpush2.bf16.msra.mxu0 0
    %359 = vmatprep.subr.bf16.mxu0 0
    %360 = vmatpush2.bf16.msra.mxu0 0
    %361 = vmatprep.subr.bf16.mxu0 0
    %362 = vmatpush2.bf16.msra.mxu0 0
    %363 = vmatprep.mubr.bf16.mxu0 0
    %364 = vmatmul.mubr.bf16.gmra.mxu0 %v323
    %v365 = vpop.f32.mrf.mxu0
    %v366 = vadd.f32 %v307, %v365
    %v367 = vpop.f32.mrf.mxu0
    %v368 = vadd.f32 %v311, %v367
    %v369 = vpop.f32.mrf.mxu0
    %v370 = vadd.f32 %v307, %v369
    %v371 = vpop.f32.mrf.mxu0
    %v372 = vadd.f32 %v311, %v371
    %373 = vdwg.mxu0
    %374 = vst [vmem:[#allocation11] sm:$0xff] %v366
    %vm375 = vcmask 523264
    %376 = vst.msk [vmem:[#allocation11 + $0x8] sm:$0xff] %vm375, %v368
    %377 = vst [vmem:[#allocation11 + $0x10] sm:$0xff] %v370
    %378 = vst.msk [vmem:[#allocation11 + $0x18] sm:$0xff] %vm375, %v372
    // Predicated region
    $region58: #{tpu_custom_call.1} parent=1 // pred_check
      _
    $region59: #{tpu_custom_call.1} parent=1 // pred_check_branch
      %380 = sbr.rel (0) target = $region61
    $region60: #{tpu_custom_call.1} parent=1 // pred_region
      %s382 = ssub.s32 512, 512
      %383 = vsyncadd [#allocation4], %s382
      %s384 = sshll.u32 [#allocation11], 4
      %s385 = int_to_ptr.vmem [resolvable:$true] %s384
      %390 = dma.vmem_to_hbm [thread:$0]  %s385, 512, %s9, [#allocation4], 256, 256, 16
    $region61: #{tpu_custom_call.1} parent=1 // pred_fallthru
      _
    // Predicated region
    $region62: #{tpu_custom_call.1} parent=1 // pred_check
      _
    $region63: #{tpu_custom_call.1} parent=1 // pred_check_branch
      %392 = sbr.rel (0) target = $region65
    $region64: #{tpu_custom_call.1} parent=1 // pred_region
      %393 = dma.done [#allocation4], 512
    $region65: #{tpu_custom_call.1} parent=1 // pred_fallthru
      _
    %394 = vsyncpa [#allocation3], 1
    %395 = vsyncpa [#allocation6], 1
    %396 = vsyncpa [#allocation9], 1
    %397 = vsyncpa [#allocation4], 1

</llo_original>
